<compile_context>
chip_gen: v7x
topology: tpu7x:2x2x1
jax: 0.10.0
libtpu: 0.0.40
codegen_flags: <defaults>
</compile_context>

<pallas_src>
import jax
import jax.numpy as jnp
from jax import lax
from jax.experimental import pallas as pl
from jax.experimental.pallas import tpu as pltpu

_MIB = 1024 * 1024
_MIN_PALLAS_ELEMENTS = 1 << 18      # below this, XLA's fused reduction beats kernel overhead
_CHUNK_F32_BYTES = 256 * 1024       # in-kernel row-chunk size (bounds elementwise temporaries)


def _round_up(x, m):
    return (x + m - 1) // m * m


def _num_tensorcores():
    """2 on v7x-class megacore parts, else 1 (sizes the 'parallel' split axis)."""
    try:
        kind = jax.devices()[0].device_kind.lower()
    except Exception:
        return 1
    # TODO(synk): on real v7x, verify with xprof that the size-2 "parallel" axis lands on both
    # TensorCores; if not, switch that axis to pltpu.CORE_PARALLEL.
    return 2 if "v7" in kind else 1


def _vmem_budget_bytes():
    try:
        cap = int(pltpu.get_tpu_info().vmem_capacity_bytes)
    except Exception:
        cap = 64 * _MIB             # conservative default (v7x per-TC VMEM)
    # Keep >=25% of physical VMEM free for Mosaic internals; never ask for more than 64 MiB.
    return min(64 * _MIB, (cap * 3) // 4)


def _make_sse_kernel(row_tile, chunk_rows, cols, rows, needs_mask):
    n_chunks = row_tile // chunk_rows

    def kernel(a_ref, b_ref, o_ref):
        # o_ref: (1, 8, cols) f32 block; its block index is constant along grid axis 1, so it
        # stays resident in VMEM across the whole reduction -> it IS the accumulator.
        @pl.when(pl.program_id(1) == 0)
        def _init():
            o_ref[...] = jnp.zeros_like(o_ref)

        if needs_mask:
            # Logical (unclamped) block index -> global base row of this tile.  Rows past
            # `rows` are either block padding or a clamped duplicate block; both must add 0.
            blk = pl.program_id(0) * pl.num_programs(1) + pl.program_id(1)
            base_row = blk * row_tile

        def accumulate(r0):
            a = a_ref[pl.ds(r0, chunk_rows), :].astype(jnp.float32)
            b = b_ref[pl.ds(r0, chunk_rows), :].astype(jnp.float32)
            d = a - b
            sq = d * d
            if needs_mask:
                row_ids = (base_row + r0
                           + lax.broadcasted_iota(jnp.int32, sq.shape, 0))
                sq = jnp.where(row_ids < rows, sq, 0.0)
            # Sublane-group adds only (tile-aligned, chunk_rows % 8 == 0): pure VPU work,
            # no cross-lane reduce in the hot loop.
            o_ref[...] += sq.reshape(chunk_rows // 8, 8, cols).sum(axis=0).reshape(1, 8, cols)

        if n_chunks == 1:
            accumulate(0)
        else:
            def body(j, carry):
                accumulate(pl.multiple_of(j * chunk_rows, chunk_rows))
                return carry
            lax.fori_loop(0, n_chunks, body, 0)

    return kernel


def _sum_sq_diff_pallas(a_flat, b_flat, *, block_rows=None, num_splits=None):
    """Global sum((a - b)^2) in float32.  Requires a_flat.size % 128 == 0 (caller checks)."""
    n = a_flat.shape[0]
    itemsize = jnp.dtype(a_flat.dtype).itemsize

    # Lane axis: widest of 512/256/128 dividing n exactly -> the 2D view is a free bitcast of
    # the flat input; no padding copy ever touches HBM.
    if n % 512 == 0:
        cols = 512
    elif n % 256 == 0:
        cols = 256
    else:
        cols = 128
    rows = n // cols

    sub = max(8, 32 // itemsize)           # sublane packing: 8 (f32) / 16 (bf16) / 32 (int8)
    splits = num_splits if num_splits is not None else _num_tensorcores()
    splits = max(1, splits)
    rows_per_split = pl.cdiv(rows, splits)

    # In-kernel chunk (rows): ~256 KiB of f32 per operand keeps elementwise temps tiny.
    chunk_rows = max(sub, (_CHUNK_F32_BYTES // (cols * 4)) // sub * sub)
    chunk_rows = min(chunk_rows, _round_up(rows_per_split, sub))
    if block_rows is not None:
        chunk_rows = min(chunk_rows, _round_up(block_rows, sub))

    vmem_limit = _vmem_budget_bytes()
    # 2 inputs x 2 pipeline buffers each, plus headroom for chunk temps / Mosaic internals.
    block_bytes = max(_MIB, min(8 * _MIB, (vmem_limit - 8 * _MIB) // 4))
    if block_rows is None:
        target_rows = max(chunk_rows, block_bytes // (cols * itemsize))
    else:
        target_rows = block_rows
    row_tile = _round_up(max(target_rows, chunk_rows), chunk_rows)
    row_tile = min(row_tile, _round_up(rows_per_split, chunk_rows))

    total_blocks = pl.cdiv(rows, row_tile)
    splits = max(1, min(splits, total_blocks))
    steps = pl.cdiv(total_blocks, splits)
    needs_mask = (rows % row_tile != 0) or (splits * steps != total_blocks)

    a2d = a_flat.reshape(rows, cols)
    b2d = b_flat.reshape(rows, cols)

    if splits * steps == total_blocks:
        in_map = lambda p, i: (p * steps + i, 0)
    else:
        # Clamp so every grid point maps to an in-range block; over-range steps re-read the
        # last block and are fully masked out inside the kernel.
        in_map = lambda p, i: (jnp.minimum(p * steps + i, total_blocks - 1), 0)

    kernel = _make_sse_kernel(row_tile, chunk_rows, cols, rows, needs_mask)

    partials = pl.pallas_call(
        kernel,
        out_shape=jax.ShapeDtypeStruct((splits, 8, cols), jnp.float32),
        grid_spec=pltpu.PrefetchScalarGridSpec(
            num_scalar_prefetch=0,
            grid=(splits, steps),
            in_specs=[
                pl.BlockSpec((row_tile, cols), in_map),
                pl.BlockSpec((row_tile, cols), in_map),
            ],
            out_specs=pl.BlockSpec((1, 8, cols), lambda p, i: (p, 0, 0)),
        ),
        compiler_params=pltpu.CompilerParams(
            dimension_semantics=("parallel", "arbitrary"),
            vmem_limit_bytes=vmem_limit,
        ),
        cost_estimate=pl.CostEstimate(
            flops=3 * n,
            transcendentals=0,
            bytes_accessed=2 * n * itemsize + splits * 8 * cols * 4,
        ),
    )(a2d, b2d)
    return jnp.sum(partials)


def joint_dist_loss(preds1, preds2, nStack=1, kpsGate=None,
                    force_pallas=False, block_rows=None, num_splits=None):
    """JAX/Pallas equivalent of JointDistLoss.forward with default constructor flags
    (nStack=1, useKPsGate=False, useSampleWeight=False).  Matching the PyTorch default path,
    a supplied kpsGate only affects the returned count, never the loss value."""
    # TODO(synk): nStack > 1 / useKPsGate / useSampleWeight constructor variants not implemented.
    assert nStack == 1, "only nStack=1 implemented (default constructor)"
    assert preds1.shape == preds2.shape
    bs, k = preds1.shape[0], preds1.shape[1]
    spatial = 1
    for s in preds1.shape[2:]:
        spatial *= s
    n = bs * k * spatial

    use_pallas = (force_pallas or n >= _MIN_PALLAS_ELEMENTS) and (n % 128 == 0)
    if use_pallas:
        sse = _sum_sq_diff_pallas(preds1.reshape(-1), preds2.reshape(-1),
                                  block_rows=block_rows, num_splits=num_splits)
    else:
        # Tiny or lane-unaligned (n % 128 != 0) inputs: XLA's fused reduction is at roofline.
        d = preds1.astype(jnp.float32) - preds2.astype(jnp.float32)
        sse = jnp.sum(d * d)

    # mean over spatial per (b, k) keypoint, summed over (b, k)  ==  total SSE / spatial
    total_loss = sse / jnp.float32(spatial)

    # kpsGate defaults to ones([bs, k]); labeled count = number of nonzero gate entries.
    if kpsGate is None:
        kps_num = jnp.float32(bs * k)
    else:
        kps_num = jnp.sum((kpsGate > 0).astype(jnp.float32))

    return total_loss, nStack * kps_num


if __name__ == "__main__":
    key = jax.random.PRNGKey(0)
    k1, k2, k3, k4 = jax.random.split(key, 4)

    def ref_loss(a, b):
        bs_, k_ = a.shape[0], a.shape[1]
        va = a.reshape(bs_, k_, -1).astype(jnp.float32)
        vb = b.reshape(bs_, k_, -1).astype(jnp.float32)
        return jnp.sum(jnp.mean((va - vb) ** 2, axis=-1))

    # 1) small f32 (2,4,16,16): single partial block -> in-kernel mask path.
    p1 = jax.random.normal(k1, (2, 4, 16, 16), dtype=jnp.float32)
    p2 = jax.random.normal(k2, (2, 4, 16, 16), dtype=jnp.float32)
    loss1, cnt1 = joint_dist_loss(p1, p2, force_pallas=True)
    loss1 = jax.block_until_ready(loss1)
    assert jnp.allclose(loss1, ref_loss(p1, p2), rtol=1e-5, atol=1e-5), (loss1, ref_loss(p1, p2))
    assert int(cnt1) == 2 * 4

    # 2) f32 (2,8,64,64), small tile -> multi-step resident-output accumulation, no mask.
    q1 = jax.random.normal(k3, (2, 8, 64, 64), dtype=jnp.float32)
    q2 = jax.random.normal(k4, (2, 8, 64, 64), dtype=jnp.float32)
    loss2, cnt2 = joint_dist_loss(q1, q2, force_pallas=True, block_rows=16)
    loss2 = jax.block_until_ready(loss2)
    assert jnp.allclose(loss2, ref_loss(q1, q2), rtol=1e-5, atol=1e-5), (loss2, ref_loss(q1, q2))
    assert int(cnt2) == 2 * 8

    # 3) f32 (2,5,64,64), forced 2-way split + ragged blocks -> clamped index_map + mask.
    r1 = jax.random.normal(k1, (2, 5, 64, 64), dtype=jnp.float32)
    r2 = jax.random.normal(k2, (2, 5, 64, 64), dtype=jnp.float32)
    loss3, _ = joint_dist_loss(r1, r2, force_pallas=True, block_rows=32, num_splits=2)
    loss3 = jax.block_until_ready(loss3)
    assert jnp.allclose(loss3, ref_loss(r1, r2), rtol=1e-5, atol=1e-5), (loss3, ref_loss(r1, r2))

    # 4) bf16 inputs stay bf16 through the HBM->VMEM DMA; f32 math in-kernel.
    s1 = q1.astype(jnp.bfloat16)
    s2 = q2.astype(jnp.bfloat16)
    loss4, _ = joint_dist_loss(s1, s2, force_pallas=True, block_rows=32)
    loss4 = jax.block_until_ready(loss4)
    assert jnp.allclose(loss4, ref_loss(s1, s2), rtol=1e-4, atol=1e-4), (loss4, ref_loss(s1, s2))

    # 5) (2,8,128,128): big enough for the automatic Pallas path; exercises the in-kernel
    #    chunked fori_loop (several 256 KiB chunks per block).
    u1 = jax.random.normal(k3, (2, 8, 128, 128), dtype=jnp.float32)
    u2 = jax.random.normal(k4, (2, 8, 128, 128), dtype=jnp.float32)
    loss5, _ = joint_dist_loss(u1, u2)
    loss5 = jax.block_until_ready(loss5)
    assert jnp.allclose(loss5, ref_loss(u1, u2), rtol=1e-5, atol=1e-5), (loss5, ref_loss(u1, u2))

    # 6) tiny lane-unaligned input takes the jnp fallback path.
    t1 = jax.random.normal(k1, (2, 3, 7, 9), dtype=jnp.float32)
    t2 = jax.random.normal(k2, (2, 3, 7, 9), dtype=jnp.float32)
    loss6, cnt6 = joint_dist_loss(t1, t2)
    loss6 = jax.block_until_ready(loss6)
    assert jnp.allclose(loss6, ref_loss(t1, t2), rtol=1e-5, atol=1e-5), (loss6, ref_loss(t1, t2))
    assert int(cnt6) == 2 * 3

    print("KERNEL_OK")
</pallas_src>

<mosaic_0001>
module attributes {stable_mosaic.version = 11 : i64} {
  func.func @kernel(%arg0: i32, %arg1: i32, %arg2: memref<8x512xf32, #tpu.memory_space<vmem>>, %arg3: memref<8x512xf32, #tpu.memory_space<vmem>>, %arg4: memref<1x8x512xf32, #tpu.memory_space<vmem>>) attributes {dimension_semantics = [#tpu.dimension_semantics<parallel>, #tpu.dimension_semantics<arbitrary>], iteration_bounds = array<i64: 1, 1>, scalar_prefetch = 0 : i64, scratch_operands = 0 : i64, tpu.core_type = #tpu.core_type<tc>, window_params = [{transform_indices = @transform_0, window_bounds = array<i64: 8, 512>}, {transform_indices = @transform_1, window_bounds = array<i64: 8, 512>}, {transform_indices = @transform_2, window_bounds = array<i64: 1, 8, 512>}]} {
    %c0_i32 = arith.constant 0 : i32
    %0 = arith.cmpi eq, %arg1, %c0_i32 : i32
    %1 = arith.extui %0 : i1 to i32
    %c0_i32_0 = arith.constant 0 : i32
    %2 = arith.cmpi ne, %1, %c0_i32_0 : i32
    scf.if %2 {
      %cst_12 = arith.constant 0.000000e+00 : f32
      %24 = vector.broadcast %cst_12 : f32 to vector<1x8x512xf32>
      %c0_13 = arith.constant 0 : index
      %c0_14 = arith.constant 0 : index
      %c0_15 = arith.constant 0 : index
      %25 = vector.load %arg4[%c0_13, %c0_14, %c0_15] : memref<1x8x512xf32, #tpu.memory_space<vmem>>, vector<1x8x512xf32>
      tpu.vector_store %arg4[%c0_13, %c0_14, %c0_15], %24 {strides = array<i32>} : memref<1x8x512xf32, #tpu.memory_space<vmem>>, vector<1x8x512xf32>,
    } else {
    }
    %c1_i32 = arith.constant 1 : i32
    %3 = arith.muli %arg0, %c1_i32 : i32
    %4 = arith.addi %3, %arg1 : i32
    %c8_i32 = arith.constant 8 : i32
    %5 = arith.muli %4, %c8_i32 : i32
    %c0 = arith.constant 0 : index
    %c0_1 = arith.constant 0 : index
    %6 = vector.load %arg2[%c0, %c0_1] : memref<8x512xf32, #tpu.memory_space<vmem>>, vector<8x512xf32>
    %c0_2 = arith.constant 0 : index
    %c0_3 = arith.constant 0 : index
    %7 = vector.load %arg3[%c0_2, %c0_3] : memref<8x512xf32, #tpu.memory_space<vmem>>, vector<8x512xf32>
    %8 = arith.subf %6, %7 : vector<8x512xf32>
    %9 = arith.mulf %8, %8 : vector<8x512xf32>
    %c0_i32_4 = arith.constant 0 : i32
    %10 = arith.addi %5, %c0_i32_4 : i32
    %11 = tpu.iota {dimensions = array<i32: 0>} : vector<8x512xi32>
    %12 = vector.broadcast %10 : i32 to vector<8x512xi32>
    %13 = arith.addi %12, %11 : vector<8x512xi32>
    %c4_i32 = arith.constant 4 : i32
    %14 = vector.broadcast %c4_i32 : i32 to vector<8x512xi32>
    %15 = arith.cmpi slt, %13, %14 : vector<8x512xi32>
    %cst = arith.constant 0.000000e+00 : f32
    %16 = vector.broadcast %cst : f32 to vector<8x512xf32>
    %17 = arith.select %15, %9, %16 : vector<8x512xi1>, vector<8x512xf32>
    %c0_5 = arith.constant 0 : index
    %c0_6 = arith.constant 0 : index
    %c0_7 = arith.constant 0 : index
    %18 = vector.load %arg4[%c0_5, %c0_6, %c0_7] : memref<1x8x512xf32, #tpu.memory_space<vmem>>, vector<1x8x512xf32>
    %19 = vector.shape_cast %17 : vector<8x512xf32> to vector<1x8x512xf32>
    %cst_8 = arith.constant dense<0.000000e+00> : vector<8x512xf32>
    %20 = vector.multi_reduction <add>, %19, %cst_8 [0] : vector<1x8x512xf32> to vector<8x512xf32>
    %21 = vector.shape_cast %20 : vector<8x512xf32> to vector<1x8x512xf32>
    %22 = arith.addf %18, %21 : vector<1x8x512xf32>
    %c0_9 = arith.constant 0 : index
    %c0_10 = arith.constant 0 : index
    %c0_11 = arith.constant 0 : index
    %23 = vector.load %arg4[%c0_9, %c0_10, %c0_11] : memref<1x8x512xf32, #tpu.memory_space<vmem>>, vector<1x8x512xf32>
    tpu.vector_store %arg4[%c0_9, %c0_10, %c0_11], %22 {strides = array<i32>} : memref<1x8x512xf32, #tpu.memory_space<vmem>>, vector<1x8x512xf32>,
    return
  }
  func.func @transform_0(%arg0: i32, %arg1: i32) -> (i32, i32) {
    %c1_i32 = arith.constant 1 : i32
    %0 = arith.muli %arg0, %c1_i32 : i32
    %1 = arith.addi %0, %arg1 : i32
    %c0_i32 = arith.constant 0 : i32
    %c0_i32_0 = arith.constant 0 : i32
    return %1, %c0_i32 : i32, i32
  }
  func.func @transform_1(%arg0: i32, %arg1: i32) -> (i32, i32) {
    %c1_i32 = arith.constant 1 : i32
    %0 = arith.muli %arg0, %c1_i32 : i32
    %1 = arith.addi %0, %arg1 : i32
    %c0_i32 = arith.constant 0 : i32
    %c0_i32_0 = arith.constant 0 : i32
    return %1, %c0_i32 : i32, i32
  }
  func.func @transform_2(%arg0: i32, %arg1: i32) -> (i32, i32, i32) {
    %c0_i32 = arith.constant 0 : i32
    %c0_i32_0 = arith.constant 0 : i32
    %c0_i32_1 = arith.constant 0 : i32
    return %arg0, %c0_i32, %c0_i32_0 : i32, i32, i32
  }
}

</mosaic_0001>

<llo_original>
// kernel: tpu_custom_call.1
$region0: #{tpu_custom_call.1}
  #allocation0 [shape = 'u32[]', space=smem, size = 0x4, offset = 0x4, fixed_abs, tag = 'smem constant byte address 0x4 - core index']
  #allocation1 [shape = 'u32[144,128]{1,0:T(1,128)}', space=vmem, size = 0x12000, scoped, tag = 'internal scratch']
  %s0 = inlined_call_operand.hbm [shape: f32[4,512], index: 0, kind: input, shape index: {}]
  %s1 = inlined_call_operand.hbm [shape: f32[4,512], index: 1, kind: input, shape index: {}]
  %s2 = inlined_call_operand.hbm [shape: f32[1,8,512], index: 2, kind: output, shape index: {}]
  %s3 = sld [smem:[#allocation0]]
  $region30: #{tpu_custom_call.1} parent=0
    _
  %s5 = ssub.s32 1, %s3
  %s6 = scalar_select 0, %s5, %s3
  $region1: #{tpu_custom_call.1} parent=0
    #allocation2 [shape = 'u8[16384]{0}', space=vmem, size = 0x4000, scoped, tag = 'input window, operand 0, single buffered']
    #allocation3 [shape = 's32[1]{0}', space=sflag, size = 0x4, scoped, tag = 'scoped memory for tpu_custom_call.1']
    #allocation4 [shape = 's32[1]{0}', space=sflag, size = 0x4, scoped, tag = 'scoped memory for tpu_custom_call.1']
    #allocation5 [shape = 'u8[16384]{0}', space=vmem, size = 0x4000, scoped, tag = 'input window, operand 1, single buffered']
    #allocation6 [shape = 's32[1]{0}', space=sflag, size = 0x4, scoped, tag = 'scoped memory for tpu_custom_call.1']
    #allocation7 [shape = 'u8[16384]{0}', space=vmem, size = 0x4000, scoped, tag = 'output window, operand 0, single buffered']
    %7 = vsyncpa [#allocation3], 0
    %8 = vsyncpa [#allocation6], 0
    %9 = vsyncpa [#allocation4], 0
    // Predicated region
    $region2: #{tpu_custom_call.1} parent=1 // pred_check
      _
    $region3: #{tpu_custom_call.1} parent=1 // pred_check_branch
      %11 = sbr.rel (0) target = $region5
    $region4: #{tpu_custom_call.1} parent=1 // pred_region
      %s12 = sadd.s32 0, 0
      %s13 = smul.u32 2, %s12
      %s14 = ssub.s32 1, %s13
      %s15 = smul.u32 64, %s14
      %s16 = smul.u32 %s15, 4
      %s18 = ssub.s32 512, %s16
      %19 = vsyncadd [#allocation3], %s18
      %p20 = scmp.ne.s32.totalorder 0, %s16
      %s21 = smul.addr %s13, 4
      %s22 = smul.addr %s21, 64
      %s23 = scalar_lea.hbm %s0, %s22
      %s24 = smul.u32 16, %s14
      %s25 = sshll.u32 [#allocation2], 4
      %s26 = int_to_ptr.vmem [resolvable:$true] %s25
      %s27 = sshll.u32 %s24, 4
      %31 = dma.hbm_to_vmem [thread:$0]  (%p20), %s23, %s27, %s26, [#allocation3], 256, 256, 16
    $region5: #{tpu_custom_call.1} parent=1 // pred_fallthru
      _
    // Predicated region
    $region6: #{tpu_custom_call.1} parent=1 // pred_check
      _
    $region7: #{tpu_custom_call.1} parent=1 // pred_check_branch
      %33 = sbr.rel (0) target = $region9
    $region8: #{tpu_custom_call.1} parent=1 // pred_region
      %s34 = sadd.s32 0, 0
      %s35 = smul.u32 2, %s34
      %s36 = ssub.s32 1, %s35
      %s37 = smul.u32 64, %s36
      %s38 = smul.u32 %s37, 4
      %s40 = ssub.s32 512, %s38
      %41 = vsyncadd [#allocation6], %s40
      %p42 = scmp.ne.s32.totalorder 0, %s38
      %s43 = smul.addr %s35, 4
      %s44 = smul.addr %s43, 64
      %s45 = scalar_lea.hbm %s1, %s44
      %s46 = smul.u32 16, %s36
      %s47 = sshll.u32 [#allocation5], 4
      %s48 = int_to_ptr.vmem [resolvable:$true] %s47
      %s49 = sshll.u32 %s46, 4
      %53 = dma.hbm_to_vmem [thread:$0]  (%p42), %s45, %s49, %s48, [#allocation6], 256, 256, 16
    $region9: #{tpu_custom_call.1} parent=1 // pred_fallthru
      _
    // Predicated region
    $region10: #{tpu_custom_call.1} parent=1 // pred_check
      _
    $region11: #{tpu_custom_call.1} parent=1 // pred_check_branch
      %55 = sbr.rel (0) target = $region13
    $region12: #{tpu_custom_call.1} parent=1 // pred_region
      %56 = dma.done [#allocation3], 512
    $region13: #{tpu_custom_call.1} parent=1 // pred_fallthru
      _
    // Predicated region
    $region14: #{tpu_custom_call.1} parent=1 // pred_check
      _
    $region15: #{tpu_custom_call.1} parent=1 // pred_check_branch
      %58 = sbr.rel (0) target = $region17
    $region16: #{tpu_custom_call.1} parent=1 // pred_region
      %59 = dma.done [#allocation6], 512
    $region17: #{tpu_custom_call.1} parent=1 // pred_fallthru
      _
    %s60 = sadd.s32 0, 0
    %s61 = smul.u32 2, %s60
    %s62 = ssub.s32 1, %s61
    %s63 = smul.u32 64, %s62
    %s64 = smul.u32 %s63, 4
    %s65 = sadd.s32 0, 0
    %s66 = smul.u32 2, %s65
    %s67 = ssub.s32 1, %s66
    %s68 = smul.u32 64, %s67
    %s69 = smul.u32 %s68, 4
    %p70 = scmp.eq.s32.totalorder 0, 0
    // Predicated region
    $region18: #{tpu_custom_call.1} parent=1 // pred_check
      %p71 = pneg %p70
    $region19: #{tpu_custom_call.1} parent=1 // pred_check_branch
      %73 = sbr.rel (%p71) target = $region21
    $region20: #{tpu_custom_call.1} parent=1 // pred_region
      %74 = vst [vmem:[#allocation7] sm:$0xff] 0.0
      %75 = vst [vmem:[#allocation7 + $0x8] sm:$0xff] 0.0
      %76 = vst [vmem:[#allocation7 + $0x10] sm:$0xff] 0.0
      %77 = vst [vmem:[#allocation7 + $0x18] sm:$0xff] 0.0
    $region21: #{tpu_custom_call.1} parent=1 // pred_fallthru
      _
    %s78 = sadd.s32 0, 0
    %s79 = smul.u32 %s78, 8
    %v80 = vld [vmem:[#allocation2] sm:$0xff]
    %v81 = vld [vmem:[#allocation2 + $0x8] sm:$0xff]
    %v82 = vld [vmem:[#allocation2 + $0x10] sm:$0xff]
    %v83 = vld [vmem:[#allocation2 + $0x18] sm:$0xff]
    %v84 = vld [vmem:[#allocation5] sm:$0xff]
    %v85 = vld [vmem:[#allocation5 + $0x8] sm:$0xff]
    %v86 = vld [vmem:[#allocation5 + $0x10] sm:$0xff]
    %v87 = vld [vmem:[#allocation5 + $0x18] sm:$0xff]
    %v88 = vsub.f32 %v80, %v84
    %v89 = vsub.f32 %v81, %v85
    %v90 = vsub.f32 %v82, %v86
    %v91 = vsub.f32 %v83, %v87
    %v92 = vmul.f32 %v88, %v88
    %v93 = vmul.f32 %v89, %v89
    %v94 = vmul.f32 %v90, %v90
    %v95 = vmul.f32 %v91, %v91
    %v96 = vlaneseq
    %v97 = vshrl.u32 %v96, 7
    %v98 = vstv %s79
    %v99 = vadd.s32 %v98, %v97
    %vm100 = vcmp.lt.s32.totalorder %v99, 4
    %v105 = vcombine.low %v92, %v94
    %v106 = vcombine.high %v92, %v94
    %v107 = vcombine.low %v93, %v95
    %v108 = vcombine.high %v93, %v95
    %v113 = vsel %vm100, %v105, 0.0
    %v114 = vsel %vm100, %v106, 0.0
    %v115 = vsel %vm100, %v107, 0.0
    %v116 = vsel %vm100, %v108, 0.0
    %v117 = vld [vmem:[#allocation7] sm:$0xff]
    %v118 = vld [vmem:[#allocation7 + $0x8] sm:$0xff]
    %v119 = vld [vmem:[#allocation7 + $0x10] sm:$0xff]
    %v120 = vld [vmem:[#allocation7 + $0x18] sm:$0xff]
    %v121 = vadd.f32 %v113, 0.0
    %v122 = vadd.f32 %v114, 0.0
    %v123 = vadd.f32 %v115, 0.0
    %v124 = vadd.f32 %v116, 0.0
    %v125 = vadd.f32 %v117, %v121
    %v126 = vadd.f32 %v118, %v122
    %v127 = vadd.f32 %v119, %v123
    %v128 = vadd.f32 %v120, %v124
    %129 = vst [vmem:[#allocation7] sm:$0xff] %v125
    %130 = vst [vmem:[#allocation7 + $0x8] sm:$0xff] %v126
    %131 = vst [vmem:[#allocation7 + $0x10] sm:$0xff] %v127
    %132 = vst [vmem:[#allocation7 + $0x18] sm:$0xff] %v128
    // Predicated region
    $region22: #{tpu_custom_call.1} parent=1 // pred_check
      _
    $region23: #{tpu_custom_call.1} parent=1 // pred_check_branch
      %134 = sbr.rel (0) target = $region25
    $region24: #{tpu_custom_call.1} parent=1 // pred_region
      %s136 = ssub.s32 512, 512
      %137 = vsyncadd [#allocation4], %s136
      %s139 = sshll.u32 [#allocation7], 4
      %s140 = int_to_ptr.vmem [resolvable:$true] %s139
      %142 = dma.vmem_to_hbm [thread:$0]  %s140, 512, %s2, [#allocation4]
    $region25: #{tpu_custom_call.1} parent=1 // pred_fallthru
      _
    // Predicated region
    $region26: #{tpu_custom_call.1} parent=1 // pred_check
      _
    $region27: #{tpu_custom_call.1} parent=1 // pred_check_branch
      %144 = sbr.rel (0) target = $region29
    $region28: #{tpu_custom_call.1} parent=1 // pred_region
      %145 = dma.done [#allocation4], 512
    $region29: #{tpu_custom_call.1} parent=1 // pred_fallthru
      _
    %146 = vsyncpa [#allocation3], 1
    %147 = vsyncpa [#allocation6], 1
    %148 = vsyncpa [#allocation4], 1

</llo_original>
